<compile_context>
chip_gen: v7x
topology: tpu7x:2x2x1
jax: 0.10.0
libtpu: 0.0.40
codegen_flags: <defaults>
</compile_context>

<pallas_src>
import jax
import jax.numpy as jnp
from jax.experimental import pallas as pl
from jax.experimental.pallas import tpu as pltpu


def _round_up(x, m):
    return (x + m - 1) // m * m


def _make_train_kernel(BT, block_bt, Vpad):
    """Targets-given path: logits tile + per-tile cross-entropy partial sum."""

    def kernel(tok_ref, table_ref, logits_ref, lpart_ref):
        # tok_ref:    (block_bt, 2)    int32   [:, 0]=idx, [:, 1]=target
        # table_ref:  (Vpad, Vpad)     f32     padded columns hold -1e30
        # logits_ref: (block_bt, Vpad) f32     lane-dense store
        # lpart_ref:  (1, 1, 128)      f32     per-tile partial CE sum
        ids = tok_ref[:, 0:1]                                          # (bt, 1)
        tgts = tok_ref[:, 1:2]                                         # (bt, 1)
        # Single shared iota reused for both one-hots.
        col = jax.lax.broadcasted_iota(jnp.int32, (block_bt, Vpad), 1)

        # Embedding lookup as one-hot matmul on the MXU (tiny-vocab case).
        onehot_idx = (col == ids).astype(jnp.float32)                  # (bt, Vpad)
        logits = jnp.dot(onehot_idx, table_ref[...],
                         preferred_element_type=jnp.float32)           # (bt, Vpad)
        logits_ref[...] = logits

        # Padded lanes already carry -1e30 (baked into the table), so the
        # log-sum-exp needs no extra lane mask: exp(-1e30 - m) == 0.
        m = jnp.max(logits, axis=-1, keepdims=True)                    # (bt, 1)
        lse = m + jnp.log(jnp.sum(jnp.exp(logits - m), axis=-1, keepdims=True))

        onehot_t = (col == tgts).astype(jnp.float32)
        picked = jnp.sum(onehot_t * logits, axis=-1, keepdims=True)    # (bt, 1)
        per_token = lse - picked                                       # (bt, 1)

        # Mask rows that are only BT padding, emit the tile's partial sum.
        pid = pl.program_id(0)
        row = pid * block_bt + jax.lax.broadcasted_iota(
            jnp.int32, (block_bt, 1), 0)
        rvalid = (row < BT).astype(jnp.float32)
        tile_sum = jnp.sum(per_token * rvalid)
        lpart_ref[...] = jnp.full((1, 1, 128), tile_sum, jnp.float32)

    return kernel


def _make_infer_kernel(block_bt, Vpad):
    """Targets=None path: embedding lookup only, no CE work."""

    def kernel(idx_ref, table_ref, logits_ref):
        ids = idx_ref[...]                                             # (bt, 1)
        col = jax.lax.broadcasted_iota(jnp.int32, (block_bt, Vpad), 1)
        onehot = (col == ids).astype(jnp.float32)
        logits_ref[...] = jnp.dot(onehot, table_ref[...],
                                  preferred_element_type=jnp.float32)

    return kernel


def bigram_forward(idx, table, targets=None, *, block_bt=1024,
                   return_padded=False):
    """Mirrors BigramLanguageModel.forward(idx, targets).

    Default return matches the PyTorch module: (logits_(B,T,V), None) when
    targets is None, else (logits_(B*T,V), scalar mean CE loss).
    With return_padded=True the (BT_pad, Vpad) padded logits are returned
    directly (padded columns hold -1e30), skipping the extra HBM copy of the
    wrapper-side slice.

    block_bt: sweep 1024-2048 on v6e/v7x; cap ~512-1024 on v5e (single vector
    store slot + lower HBM bandwidth).
    """
    B, T = idx.shape
    V = table.shape[0]
    BT = B * T

    # Lane-dense padded vocab and 8-aligned BT tiling.
    Vpad = _round_up(V, 128)
    block_bt = _round_up(min(block_bt, _round_up(BT, 8)), 8)
    BT_pad = _round_up(BT, block_bt)
    n_tiles = BT_pad // block_bt

    # Bake the padded-lane mask into the table: the one-hot matmul then emits
    # -1e30 in columns >= V for free (0 * -1e30 = 0 on unselected rows).
    # Must be a finite sentinel, NOT -inf, to avoid 0 * inf = NaN.
    table_p = jnp.zeros((Vpad, Vpad), jnp.float32)
    table_p = table_p.at[:V, :V].set(table.astype(jnp.float32))
    if Vpad > V:
        table_p = table_p.at[:, V:].set(jnp.float32(-1e30))

    table_spec = pl.BlockSpec((Vpad, Vpad), lambda i: (0, 0))
    logits_spec = pl.BlockSpec((block_bt, Vpad), lambda i: (i, 0))
    cparams = pltpu.CompilerParams(dimension_semantics=("parallel",))

    if targets is None:
        idx_p = jnp.zeros((BT_pad, 1), jnp.int32).at[:BT, 0].set(
            idx.reshape(-1).astype(jnp.int32))
        cost = pl.CostEstimate(
            flops=2 * BT_pad * Vpad * Vpad,
            transcendentals=0,
            bytes_accessed=BT_pad * Vpad * 4 + BT_pad * 4 + Vpad * Vpad * 4)
        logits_pad = pl.pallas_call(
            _make_infer_kernel(block_bt, Vpad),
            out_shape=jax.ShapeDtypeStruct((BT_pad, Vpad), jnp.float32),
            grid_spec=pltpu.PrefetchScalarGridSpec(
                num_scalar_prefetch=0,
                grid=(n_tiles,),
                in_specs=[pl.BlockSpec((block_bt, 1), lambda i: (i, 0)),
                          table_spec],
                out_specs=logits_spec),
            compiler_params=cparams,
            cost_estimate=cost,
        )(idx_p, table_p)
        if return_padded:
            return logits_pad, None
        return logits_pad[:BT, :V].reshape(B, T, V), None

    # Merge idx and targets into one narrow input: one DMA stream / buffer.
    tok_p = jnp.zeros((BT_pad, 2), jnp.int32)
    tok_p = tok_p.at[:BT, 0].set(idx.reshape(-1).astype(jnp.int32))
    tok_p = tok_p.at[:BT, 1].set(targets.reshape(-1).astype(jnp.int32))

    cost = pl.CostEstimate(
        flops=2 * BT_pad * Vpad * Vpad + 6 * BT_pad * Vpad,
        transcendentals=BT_pad * Vpad + BT_pad,
        bytes_accessed=(BT_pad * Vpad * 4 + BT_pad * 2 * 4
                        + Vpad * Vpad * 4 + n_tiles * 128 * 4))

    logits_pad, lpart = pl.pallas_call(
        _make_train_kernel(BT, block_bt, Vpad),
        out_shape=(
            jax.ShapeDtypeStruct((BT_pad, Vpad), jnp.float32),
            jax.ShapeDtypeStruct((n_tiles, 1, 128), jnp.float32),
        ),
        grid_spec=pltpu.PrefetchScalarGridSpec(
            num_scalar_prefetch=0,
            grid=(n_tiles,),
            in_specs=[pl.BlockSpec((block_bt, 2), lambda i: (i, 0)),
                      table_spec],
            out_specs=(
                logits_spec,
                pl.BlockSpec((1, 1, 128), lambda i: (i, 0, 0)),
            )),
        compiler_params=cparams,
        cost_estimate=cost,
    )(tok_p, table_p)

    loss = jnp.sum(lpart[:, 0, 0]) / BT
    if return_padded:
        return logits_pad, loss
    return logits_pad[:BT, :V], loss


if __name__ == "__main__":
    key = jax.random.PRNGKey(0)
    k_tab, k_idx, k_tgt = jax.random.split(key, 3)

    vocab_size = 65   # e.g. tiny-shakespeare character vocab
    B, T = 2, 8

    # nn.Embedding default init: N(0, 1)
    table = jax.random.normal(k_tab, (vocab_size, vocab_size), jnp.float32)
    idx = jax.random.randint(k_idx, (B, T), 0, vocab_size, jnp.int32)
    targets = jax.random.randint(k_tgt, (B, T), 0, vocab_size, jnp.int32)

    # --- Pallas kernel: multi-tile grid over BT (block_bt=8 -> 2 tiles) ---
    logits, loss = bigram_forward(idx, table, targets, block_bt=8)
    logits = jax.block_until_ready(logits)
    loss = jax.block_until_ready(loss)

    # Default (large-tile) tiling should agree (clamps to one tile here).
    logits_d, loss_d = bigram_forward(idx, table, targets)
    logits_d = jax.block_until_ready(logits_d)
    loss_d = jax.block_until_ready(loss_d)

    # Padded fast path (no wrapper-side slice copy).
    logits_pp, loss_pp = bigram_forward(idx, table, targets, block_bt=8,
                                        return_padded=True)
    logits_pp = jax.block_until_ready(logits_pp)
    loss_pp = jax.block_until_ready(loss_pp)

    # Inference path (no targets, no CE work).
    logits_nt, loss_nt = bigram_forward(idx, table, None, block_bt=8)
    logits_nt = jax.block_until_ready(logits_nt)

    # --- Pure-JAX reference ---
    ref_logits_btc = table[idx]                                   # (B, T, V)
    ref_logits = ref_logits_btc.reshape(B * T, vocab_size)
    logp = jax.nn.log_softmax(ref_logits, axis=-1)
    ref_loss = -jnp.mean(logp[jnp.arange(B * T), targets.reshape(-1)])

    assert logits.shape == (B * T, vocab_size)
    assert logits_nt.shape == (B, T, vocab_size)
    assert loss_nt is None
    assert jnp.allclose(logits, ref_logits, atol=1e-5, rtol=1e-5)
    assert jnp.allclose(logits_d, ref_logits, atol=1e-5, rtol=1e-5)
    assert jnp.allclose(logits_nt, ref_logits_btc, atol=1e-5, rtol=1e-5)
    assert jnp.allclose(loss, ref_loss, atol=1e-5, rtol=1e-5)
    assert jnp.allclose(loss_d, ref_loss, atol=1e-5, rtol=1e-5)
    # Padded fast path: valid region matches, padded columns are masked.
    assert jnp.allclose(logits_pp[:B * T, :vocab_size], ref_logits,
                        atol=1e-5, rtol=1e-5)
    assert bool(jnp.all(logits_pp[:B * T, vocab_size:] < -1e29))
    assert jnp.allclose(loss_pp, ref_loss, atol=1e-5, rtol=1e-5)

    print("KERNEL_OK")
</pallas_src>

<mosaic_0001>
module attributes {stable_mosaic.version = 11 : i64} {
  func.func @kernel(%arg0: i32, %arg1: memref<8x2xi32, #tpu.memory_space<vmem>>, %arg2: memref<128x128xf32, #tpu.memory_space<vmem>>, %arg3: memref<8x128xf32, #tpu.memory_space<vmem>>, %arg4: memref<1x1x128xf32, #tpu.memory_space<vmem>>) attributes {dimension_semantics = [#tpu.dimension_semantics<parallel>], iteration_bounds = array<i64: 2>, scalar_prefetch = 0 : i64, scratch_operands = 0 : i64, tpu.core_type = #tpu.core_type<tc>, window_params = [{transform_indices = @transform_0, window_bounds = array<i64: 8, 2>}, {pipeline_mode = #tpu.pipeline_mode<synchronous>, transform_indices = @transform_1, window_bounds = array<i64: 128, 128>}, {transform_indices = @transform_2, window_bounds = array<i64: 8, 128>}, {transform_indices = @transform_3, window_bounds = array<i64: 1, 1, 128>}]} {
    %c0 = arith.constant 0 : index
    %c0_0 = arith.constant 0 : index
    %0 = vector.load %arg1[%c0, %c0_0] : memref<8x2xi32, #tpu.memory_space<vmem>>, vector<8x1xi32>
    %c0_1 = arith.constant 0 : index
    %c1 = arith.constant 1 : index
    %1 = vector.load %arg1[%c0_1, %c1] : memref<8x2xi32, #tpu.memory_space<vmem>>, vector<8x1xi32>
    %2 = tpu.iota {dimensions = array<i32: 1>} : vector<8x128xi32>
    %3 = vector.broadcast %0 : vector<8x1xi32> to vector<8x128xi32>
    %4 = arith.cmpi eq, %2, %3 : vector<8x128xi32>
    %5 = arith.extui %4 : vector<8x128xi1> to vector<8x128xi32>
    %6 = arith.sitofp %5 : vector<8x128xi32> to vector<8x128xf32>
    %c0_2 = arith.constant 0 : index
    %c0_3 = arith.constant 0 : index
    %7 = vector.load %arg2[%c0_2, %c0_3] : memref<128x128xf32, #tpu.memory_space<vmem>>, vector<128x128xf32>
    %cst = arith.constant dense<0.000000e+00> : vector<8x128xf32>
    %8 = tpu.matmul %6, %7, %cst {dimension_numbers = #tpu.dot_dimension_numbers<[1], [0], [0], [1], [0, 0, 1, 1], [], []>} : vector<8x128xf32>, vector<128x128xf32>, vector<8x128xf32> -> vector<8x128xf32>
    %c0_4 = arith.constant 0 : index
    %c0_5 = arith.constant 0 : index
    %9 = vector.load %arg3[%c0_4, %c0_5] : memref<8x128xf32, #tpu.memory_space<vmem>>, vector<8x128xf32>
    tpu.vector_store %arg3[%c0_4, %c0_5], %8 {strides = array<i32>} : memref<8x128xf32, #tpu.memory_space<vmem>>, vector<8x128xf32>,
    %cst_6 = arith.constant dense<0xFF800000> : vector<8xf32>
    %10 = vector.multi_reduction <maximumf>, %8, %cst_6 [1] : vector<8x128xf32> to vector<8xf32>
    %11 = vector.shape_cast %10 : vector<8xf32> to vector<8x1xf32>
    %12 = vector.broadcast %11 : vector<8x1xf32> to vector<8x128xf32>
    %13 = arith.subf %8, %12 : vector<8x128xf32>
    %14 = math.exp %13 : vector<8x128xf32>
    %cst_7 = arith.constant dense<0.000000e+00> : vector<8xf32>
    %15 = vector.multi_reduction <add>, %14, %cst_7 [1] : vector<8x128xf32> to vector<8xf32>
    %16 = vector.shape_cast %15 : vector<8xf32> to vector<8x1xf32>
    %17 = math.log %16 : vector<8x1xf32>
    %18 = arith.addf %11, %17 : vector<8x1xf32>
    %19 = vector.broadcast %1 : vector<8x1xi32> to vector<8x128xi32>
    %20 = arith.cmpi eq, %2, %19 : vector<8x128xi32>
    %21 = arith.extui %20 : vector<8x128xi1> to vector<8x128xi32>
    %22 = arith.sitofp %21 : vector<8x128xi32> to vector<8x128xf32>
    %23 = arith.mulf %22, %8 : vector<8x128xf32>
    %cst_8 = arith.constant dense<0.000000e+00> : vector<8xf32>
    %24 = vector.multi_reduction <add>, %23, %cst_8 [1] : vector<8x128xf32> to vector<8xf32>
    %25 = vector.shape_cast %24 : vector<8xf32> to vector<8x1xf32>
    %26 = arith.subf %18, %25 : vector<8x1xf32>
    %c8_i32 = arith.constant 8 : i32
    %27 = arith.muli %arg0, %c8_i32 : i32
    %28 = tpu.iota {dimensions = array<i32: 0>} : vector<8x1xi32>
    %29 = vector.broadcast %27 : i32 to vector<8x1xi32>
    %30 = arith.addi %29, %28 : vector<8x1xi32>
    %c16_i32 = arith.constant 16 : i32
    %31 = vector.broadcast %c16_i32 : i32 to vector<8x1xi32>
    %32 = arith.cmpi slt, %30, %31 : vector<8x1xi32>
    %33 = arith.extui %32 : vector<8x1xi1> to vector<8x1xi32>
    %34 = arith.sitofp %33 : vector<8x1xi32> to vector<8x1xf32>
    %35 = arith.mulf %26, %34 : vector<8x1xf32>
    %36 = vector.shape_cast %35 : vector<8x1xf32> to vector<1x8x1xf32>
    %cst_9 = arith.constant dense<0.000000e+00> : vector<1xf32>
    %37 = vector.multi_reduction <add>, %36, %cst_9 [1, 2] : vector<1x8x1xf32> to vector<1xf32>
    %38 = vector.shape_cast %37 : vector<1xf32> to vector<1x1x1xf32>
    %39 = vector.extract %38[0, 0, 0] : f32 from vector<1x1x1xf32>
    %40 = vector.broadcast %39 : f32 to vector<1x1x128xf32>
    %c0_10 = arith.constant 0 : index
    %c0_11 = arith.constant 0 : index
    %c0_12 = arith.constant 0 : index
    %41 = vector.load %arg4[%c0_10, %c0_11, %c0_12] : memref<1x1x128xf32, #tpu.memory_space<vmem>>, vector<1x1x128xf32>
    tpu.vector_store %arg4[%c0_10, %c0_11, %c0_12], %40 {strides = array<i32>} : memref<1x1x128xf32, #tpu.memory_space<vmem>>, vector<1x1x128xf32>,
    return
  }
  func.func @transform_0(%arg0: i32) -> (i32, i32) {
    %c0_i32 = arith.constant 0 : i32
    %c0_i32_0 = arith.constant 0 : i32
    return %arg0, %c0_i32 : i32, i32
  }
  func.func @transform_1(%arg0: i32) -> (i32, i32) {
    %c0_i32 = arith.constant 0 : i32
    %c0_i32_0 = arith.constant 0 : i32
    %c0_i32_1 = arith.constant 0 : i32
    return %c0_i32, %c0_i32_0 : i32, i32
  }
  func.func @transform_2(%arg0: i32) -> (i32, i32) {
    %c0_i32 = arith.constant 0 : i32
    %c0_i32_0 = arith.constant 0 : i32
    return %arg0, %c0_i32 : i32, i32
  }
  func.func @transform_3(%arg0: i32) -> (i32, i32, i32) {
    %c0_i32 = arith.constant 0 : i32
    %c0_i32_0 = arith.constant 0 : i32
    %c0_i32_1 = arith.constant 0 : i32
    return %arg0, %c0_i32, %c0_i32_0 : i32, i32, i32
  }
}

</mosaic_0001>

<llo_original>
// kernel: tpu_custom_call.1
$region0: #{tpu_custom_call.1}
  #allocation0 [shape = 'u32[]', space=smem, size = 0x4, offset = 0x4, fixed_abs, tag = 'smem constant byte address 0x4 - core index']
  #allocation1 [shape = 'u32[144,128]{1,0:T(1,128)}', space=vmem, size = 0x12000, scoped, tag = 'internal scratch']
  %s0 = inlined_call_operand.vmem [shape: s32[16,2], index: 0, kind: input, shape index: {}]
  %s1 = inlined_call_operand.hbm [shape: f32[128,128], index: 1, kind: input, shape index: {}]
  %s2 = inlined_call_operand.hbm [shape: f32[16,128], index: 2, kind: output, shape index: {0}]
  %s3 = inlined_call_operand.hbm [shape: f32[2,1,128], index: 3, kind: output, shape index: {1}]
  %4 = xla_tuple %s2, %s3
  %s5 = sld [smem:[#allocation0]]
  $region53: #{tpu_custom_call.1} parent=0
    _
  %s7 = ssub.s32 1, %s5
  %s8 = scalar_select 0, %s7, %s5
  $region1: #{tpu_custom_call.1} parent=0
    #allocation2 [shape = 'u8[65536]{0}', space=vmem, size = 0x10000, scoped, tag = 'input window, operand 1, single buffered']
    #allocation3 [shape = 's32[2]{0}', space=sflag, size = 0x8, scoped, tag = 'scoped memory for tpu_custom_call.1']
    #allocation4 [shape = 's32[2]{0}', space=sflag, size = 0x8, scoped, tag = 'scoped memory for tpu_custom_call.1']
    #allocation5 [shape = 'u8[8192]{0}', space=vmem, size = 0x2000, scoped, tag = 'output window, operand 0']
    #allocation6 [shape = 'u8[1024]{0}', space=vmem, size = 0x400, scoped, tag = 'output window, operand 1']
    #allocation7 [shape = 's32[2]{0}', space=sflag, size = 0x8, scoped, tag = 'scoped memory for tpu_custom_call.1']
    %9 = vsyncpa [#allocation3], 0
    %10 = vsyncpa [#allocation4], 0
    %s11 = scalar_lea.sflag [#allocation4], 1
    %12 = vsyncpa %s11, 0
    %13 = vsyncpa [#allocation7], 0
    %s14 = scalar_lea.sflag [#allocation7], 1
    %15 = vsyncpa %s14, 0
    loop: start=0, step=1, limit=4
    $region2: #{tpu_custom_call.1} parent=1 // loop_pre_header
      _
    $region3: #{tpu_custom_call.1} parent=1 // loop_header
      %s17 = sphi 0, %s21
      %p18 = scmp.ge.s32.totalorder %s17, 4
      %s27 = sphi 0, %s29
      %s30 = sphi 0, %s27
      %s31 = sphi 0, %s30
      %s47 = sphi 0, %s31
      %s51 = sphi 0, %s51
      %s53 = sphi 0, %s51
      %s54 = sphi 0, %s53
      %s68 = sphi 0, %s54
      %s74 = sphi 0, %s76
      %s77 = sphi 0, %s74
      %s78 = sphi 0, %s77
      %s94 = sphi 0, %s78
      %s100 = sphi 0, %s102
      %s103 = sphi 0, %s100
      %s104 = sphi 0, %s103
      %s120 = sphi 0, %s104
    $region4: #{tpu_custom_call.1} parent=1 // loop_header_branch
      %20 = sbr.rel (%p18) target = $region8
    $region5: #{tpu_custom_call.1} parent=1 // loop_body
      %s22 = ssub.s32 %s17, 1
      %s23 = ssub.s32 %s17, 2
      %s24 = sadd.s32 %s17, 1
      %s25 = ssub.s32 %s17, %s24
      %p26 = scmp.eq.s32.totalorder %s25, 0
      %s28 = sadd.s32 %s27, 1
      %s29 = scalar_select %p26, %s27, %s28
      %p32 = pneg %p26
      %p33 = scmp.eq.s32.totalorder %s17, 1
      %p34 = por %p32, %p33
      %p35 = scmp.ne.s32.totalorder %s27, %s30
      %p36 = scmp.eq.s32.totalorder %s17, 0
      %p37 = por %p35, %p36
      %p38 = scmp.ne.s32.totalorder %s27, %s30
      %p39 = scmp.eq.s32.totalorder %s22, 1
      %p40 = por %p38, %p39
      %p41 = scmp.ne.s32.totalorder %s30, %s31
      %p42 = scmp.eq.s32.totalorder %s22, 0
      %p43 = por %p41, %p42
      %p44 = scmp.ne.s32.totalorder %s30, %s31
      %p45 = scmp.eq.s32.totalorder %s23, 1
      %p46 = por %p44, %p45
      %p48 = scmp.ne.s32.totalorder %s31, %s47
      %p49 = scmp.eq.s32.totalorder %s23, 0
      %p50 = por %p48, %p49
      %s52 = sadd.s32 %s51, 1
      %p55 = scmp.eq.s32.totalorder %s17, 1
      %p56 = scmp.ne.s32.totalorder %s51, %s53
      %p57 = scmp.eq.s32.totalorder %s17, 0
      %p58 = por %p56, %p57
      %p59 = scmp.ne.s32.totalorder %s51, %s53
      %p60 = scmp.eq.s32.totalorder %s22, 1
      %p61 = por %p59, %p60
      %p62 = scmp.ne.s32.totalorder %s53, %s54
      %p63 = scmp.eq.s32.totalorder %s22, 0
      %p64 = por %p62, %p63
      %p65 = scmp.ne.s32.totalorder %s53, %s54
      %p66 = scmp.eq.s32.totalorder %s23, 1
      %p67 = por %p65, %p66
      %p69 = scmp.ne.s32.totalorder %s54, %s68
      %p70 = scmp.eq.s32.totalorder %s23, 0
      %p71 = por %p69, %p70
      %s72 = ssub.s32 %s17, %s24
      %p73 = scmp.eq.s32.totalorder %s72, 0
      %s75 = sadd.s32 %s74, 1
      %s76 = scalar_select %p73, %s74, %s75
      %p79 = pneg %p73
      %p80 = scmp.eq.s32.totalorder %s17, 1
      %p81 = por %p79, %p80
      %p82 = scmp.ne.s32.totalorder %s74, %s77
      %p83 = scmp.eq.s32.totalorder %s17, 0
      %p84 = por %p82, %p83
      %p85 = scmp.ne.s32.totalorder %s74, %s77
      %p86 = scmp.eq.s32.totalorder %s22, 1
      %p87 = por %p85, %p86
      %p88 = scmp.ne.s32.totalorder %s77, %s78
      %p89 = scmp.eq.s32.totalorder %s22, 0
      %p90 = por %p88, %p89
      %p91 = scmp.ne.s32.totalorder %s77, %s78
      %p92 = scmp.eq.s32.totalorder %s23, 1
      %p93 = por %p91, %p92
      %p95 = scmp.ne.s32.totalorder %s78, %s94
      %p96 = scmp.eq.s32.totalorder %s23, 0
      %p97 = por %p95, %p96
      %s98 = ssub.s32 %s17, %s24
      %p99 = scmp.eq.s32.totalorder %s98, 0
      %s101 = sadd.s32 %s100, 1
      %s102 = scalar_select %p99, %s100, %s101
      %p105 = pneg %p99
      %p106 = scmp.eq.s32.totalorder %s17, 1
      %p107 = por %p105, %p106
      %p108 = scmp.ne.s32.totalorder %s100, %s103
      %p109 = scmp.eq.s32.totalorder %s17, 0
      %p110 = por %p108, %p109
      %p111 = scmp.ne.s32.totalorder %s100, %s103
      %p112 = scmp.eq.s32.totalorder %s22, 1
      %p113 = por %p111, %p112
      %p114 = scmp.ne.s32.totalorder %s103, %s104
      %p115 = scmp.eq.s32.totalorder %s22, 0
      %p116 = por %p114, %p115
      %p117 = scmp.ne.s32.totalorder %s103, %s104
      %p118 = scmp.eq.s32.totalorder %s23, 1
      %p119 = por %p117, %p118
      %p121 = scmp.ne.s32.totalorder %s104, %s120
      %p122 = scmp.eq.s32.totalorder %s23, 0
      %p123 = por %p121, %p122
      %p124 = scmp.le.s32.totalorder 1, %s17
      %p125 = scmp.lt.s32.totalorder %s17, 3
      %p126 = pnand %p124, %p125
      %p127 = pneg %p126
      // Predicated region
      $region9: #{tpu_custom_call.1} parent=5 // pred_check
        _
      $region10: #{tpu_custom_call.1} parent=5 // pred_check_branch
        %129 = sbr.rel (%p126) target = $region12
      $region11: #{tpu_custom_call.1} parent=5 // pred_region
        %s130 = ssub.s32 %s17, 1
        // Predicated region
        $region13: #{tpu_custom_call.1} parent=11 // pred_check
          %p131 = pneg %p64
        $region14: #{tpu_custom_call.1} parent=11 // pred_check_branch
          %133 = sbr.rel (%p131) target = $region16
        $region15: #{tpu_custom_call.1} parent=11 // pred_region
          %s135 = ssub.s32 2048, 2048
          %136 = vsyncadd [#allocation3], %s135
          %s137 = sshll.u32 [#allocation2], 4
          %s138 = int_to_ptr.vmem [resolvable:$true] %s137
          %143 = dma.hbm_to_vmem [thread:$0]  %s1, 2048, %s138, [#allocation3], 128, 128, 8
        $region16: #{tpu_custom_call.1} parent=11 // pred_fallthru
          _
      $region12: #{tpu_custom_call.1} parent=5 // pred_fallthru
        _
      %p144 = scmp.lt.s32.totalorder %s17, 2
      // Predicated region
      $region17: #{tpu_custom_call.1} parent=5 // pred_check
        %p145 = pneg %p144
      $region18: #{tpu_custom_call.1} parent=5 // pred_check_branch
        %147 = sbr.rel (%p145) target = $region20
      $region19: #{tpu_custom_call.1} parent=5 // pred_region
        // Predicated region
        $region21: #{tpu_custom_call.1} parent=19 // pred_check
          %p148 = pneg %p37
        $region22: #{tpu_custom_call.1} parent=19 // pred_check_branch
          %150 = sbr.rel (%p148) target = $region24
        $region23: #{tpu_custom_call.1} parent=19 // pred_region
          %p151 = scmp.lt.s32.totalorder %s17, 1
          %s152 = scalar_select %p151, %s17, 1
          %s153 = smul.addr %s152, 8
          %s154 = scalar_lea.vmem %s0, %s153
        $region24: #{tpu_custom_call.1} parent=19 // pred_fallthru
          _
      $region20: #{tpu_custom_call.1} parent=5 // pred_fallthru
        _
      %p155 = scmp.le.s32.totalorder 1, %s17
      %p156 = scmp.lt.s32.totalorder %s17, 3
      %p157 = pnand %p155, %p156
      %p158 = pneg %p157
      // Predicated region
      $region25: #{tpu_custom_call.1} parent=5 // pred_check
        _
      $region26: #{tpu_custom_call.1} parent=5 // pred_check_branch
        %160 = sbr.rel (%p157) target = $region28
      $region27: #{tpu_custom_call.1} parent=5 // pred_region
        %s161 = ssub.s32 %s17, 1
        // Predicated region
        $region29: #{tpu_custom_call.1} parent=27 // pred_check
          %p162 = pneg %p64
        $region30: #{tpu_custom_call.1} parent=27 // pred_check_branch
          %164 = sbr.rel (%p162) target = $region32
        $region31: #{tpu_custom_call.1} parent=27 // pred_region
          %165 = dma.done [#allocation3], 2048
        $region32: #{tpu_custom_call.1} parent=27 // pred_fallthru
          _
        %p166 = scmp.lt.s32.totalorder %s22, 1
        %s167 = scalar_select %p166, %s22, 1
        %s168 = smul.addr %s167, 8
        %s169 = scalar_lea.vmem %s0, %s168
        %p170 = pneg %p43
        %p171 = pneg %p40
        %p172 = pneg %p64
        %p173 = pneg %p61
        %p174 = pneg %p90
        %p175 = pneg %p87
        %s176 = sand.u32 %s77, 1
        %s177 = scalar_lea.sflag [#allocation4], %s176
        %s178 = sand.u32 %s77, 1
        %s179 = smul.addr %s178, 8
        %s180 = scalar_lea.vmem [#allocation5], %s179
        %p181 = pneg %p116
        %p182 = pneg %p113
        %s183 = sand.u32 %s103, 1
        %s184 = scalar_lea.sflag [#allocation7], %s183
        %s185 = sand.u32 %s103, 1
        %s186 = scalar_lea.vmem [#allocation6], %s185
        %p187 = scmp.lt.s32.totalorder %s22, 1
        %s188 = scalar_select %p187, %s22, 1
        %s189 = smul.addr %s188, 8
        %s190 = scalar_lea.vmem %s0, %s189
        %v191 = vld [vmem:[%s190] sm:$0xff]
        %v192 = vlaneseq
        %v193 = vand.u32 %v192, 127
        %194 = vset.pattern.permute.xlu0 0
        %195 = vperm.xlu0 %194, %v191
        %v196 = vpop.permute.xlu0 %195
        %vm197 = vcmp.eq.s32.totalorder %v193, %v196
        %v198 = vsel %vm197, 1, 0
        %v199 = vcvt.s32.f32 %v198
        %v200 = vld [vmem:[#allocation2] sm:$0xff]
        %v201 = vld [vmem:[#allocation2 + $0x8] sm:$0xff]
        %v202 = vld [vmem:[#allocation2 + $0x10] sm:$0xff]
        %v203 = vld [vmem:[#allocation2 + $0x18] sm:$0xff]
        %v204 = vld [vmem:[#allocation2 + $0x20] sm:$0xff]
        %v205 = vld [vmem:[#allocation2 + $0x28] sm:$0xff]
        %v206 = vld [vmem:[#allocation2 + $0x30] sm:$0xff]
        %v207 = vld [vmem:[#allocation2 + $0x38] sm:$0xff]
        %v208 = vld [vmem:[#allocation2 + $0x40] sm:$0xff]
        %v209 = vld [vmem:[#allocation2 + $0x48] sm:$0xff]
        %v210 = vld [vmem:[#allocation2 + $0x50] sm:$0xff]
        %v211 = vld [vmem:[#allocation2 + $0x58] sm:$0xff]
        %v212 = vld [vmem:[#allocation2 + $0x60] sm:$0xff]
        %v213 = vld [vmem:[#allocation2 + $0x68] sm:$0xff]
        %v214 = vld [vmem:[#allocation2 + $0x70] sm:$0xff]
        %v215 = vld [vmem:[#allocation2 + $0x78] sm:$0xff]
        %216 = vmatprep.subr.mxu0 0.0
        %217 = vmatpush1.msra.mxu0 %v200
        %218 = vmatprep.subr.mxu0 0.0
        %219 = vmatpush1.msra.mxu0 %v201
        %220 = vmatprep.subr.mxu0 0.0
        %221 = vmatpush1.msra.mxu0 %v202
        %222 = vmatprep.subr.mxu0 0.0
        %223 = vmatpush1.msra.mxu0 %v203
        %224 = vmatprep.subr.mxu0 0.0
        %225 = vmatpush1.msra.mxu0 %v204
        %226 = vmatprep.subr.mxu0 0.0
        %227 = vmatpush1.msra.mxu0 %v205
        %228 = vmatprep.subr.mxu0 0.0
        %229 = vmatpush1.msra.mxu0 %v206
        %230 = vmatprep.subr.mxu0 0.0
        %231 = vmatpush1.msra.mxu0 %v207
        %232 = vmatprep.subr.mxu0 0.0
        %233 = vmatpush1.msra.mxu0 %v208
        %234 = vmatprep.subr.mxu0 0.0
        %235 = vmatpush1.msra.mxu0 %v209
        %236 = vmatprep.subr.mxu0 0.0
        %237 = vmatpush1.msra.mxu0 %v210
        %238 = vmatprep.subr.mxu0 0.0
        %239 = vmatpush1.msra.mxu0 %v211
        %240 = vmatprep.subr.mxu0 0.0
        %241 = vmatpush1.msra.mxu0 %v212
        %242 = vmatprep.subr.mxu0 0.0
        %243 = vmatpush1.msra.mxu0 %v213
        %244 = vmatprep.subr.mxu0 0.0
        %245 = vmatpush1.msra.mxu0 %v214
        %246 = vmatprep.subr.mxu0 0.0
        %247 = vmatpush1.msra.mxu0 %v215
        %248 = vmatprep.subr.mxu0 0.0
        %249 = vmatpush1.msra.mxu0 0.0
        %250 = vmatprep.subr.mxu0 0.0
        %251 = vmatpush1.msra.mxu0 0.0
        %252 = vmatprep.subr.mxu0 0.0
        %253 = vmatpush1.msra.mxu0 0.0
        %254 = vmatprep.subr.mxu0 0.0
        %255 = vmatpush1.msra.mxu0 0.0
        %256 = vmatprep.subr.mxu0 0.0
        %257 = vmatpush1.msra.mxu0 0.0
        %258 = vmatprep.subr.mxu0 0.0
        %259 = vmatpush1.msra.mxu0 0.0
        %260 = vmatprep.subr.mxu0 0.0
        %261 = vmatpush1.msra.mxu0 0.0
        %262 = vmatprep.subr.mxu0 0.0
        %263 = vmatpush1.msra.mxu0 0.0
        %264 = vmatprep.subr.mxu0 0.0
        %265 = vmatpush1.msra.mxu0 0.0
        %266 = vmatprep.subr.mxu0 0.0
        %267 = vmatpush1.msra.mxu0 0.0
        %268 = vmatprep.subr.mxu0 0.0
        %269 = vmatpush1.msra.mxu0 0.0
        %270 = vmatprep.subr.mxu0 0.0
        %271 = vmatpush1.msra.mxu0 0.0
        %272 = vmatprep.subr.mxu0 0.0
        %273 = vmatpush1.msra.mxu0 0.0
        %274 = vmatprep.subr.mxu0 0.0
        %275 = vmatpush1.msra.mxu0 0.0
        %276 = vmatprep.subr.mxu0 0.0
        %277 = vmatpush1.msra.mxu0 0.0
        %278 = vmatprep.subr.mxu0 0.0
        %279 = vmatpush1.msra.mxu0 0.0
        %280 = vmatprep.mubr.f32.mxu0 0.0
        %281 = vmatmul.mubr.f32.gmra.mrb[0].mxu0 %v199
        %v282 = vpop.f32.mrb[0].mxu0
        %v283 = vadd.f32 0.0, %v282
        %v284 = vpop.f32.mrb[0].mxu0
        %285 = vdwg.mxu0
        %286 = vst [vmem:[%s180] sm:$0xff] %v283
        %287 = vmax.xlane.f32.xlu0 %v283
        %v288 = vpop.xlane.xlu0 %287
        %v289 = vsub.f32 %v283, %v288
        %v290 = vmul.f32 %v289, 1.442695
        %v291 = vpow.pop %v290
        %292 = vadd.xlane.f32.xlu0 %v291
        %v293 = vpop.xlane.xlu0 %292
        %v294 = vlog2.pop %v293
        %v295 = vmul.f32 %v294, 0.6931472
        %v296 = vadd.f32 %v288, %v295
        %297 = vset.pattern.permute.xlu0 1
        %298 = vperm.xlu0 %297, %v191
        %v299 = vpop.permute.xlu0 %298
        %vm300 = vcmp.eq.s32.totalorder %v193, %v299
        %v301 = vsel %vm300, 1, 0
        %v302 = vcvt.s32.f32 %v301
        %v303 = vmul.f32 %v302, %v283
        %304 = vadd.xlane.f32.xlu0 %v303
        %v305 = vpop.xlane.xlu0 %304
        %v306 = vsub.f32 %v296, %v305
        %s307 = smul.u32 %s22, 8
        %v308 = vlaneseq
        %v309 = vshrl.u32 %v308, 7
        %v310 = vstv %s307
        %v311 = vadd.s32 %v310, %v309
        %vm312 = vcmp.lt.s32.totalorder %v311, 16
        %v313 = vsel %vm312, 1, 0
        %v314 = vcvt.s32.f32 %v313
        %v315 = vmul.f32 %v306, %v314
        %vm316 = vcmask 7168
        %v317 = vsel %vm316, %v315, 0.0
        %318 = vadd.xlane.f32.xlu0 %v317
        %v319 = vpop.xlane.xlu0 %318
        %v320 = vrot.slane %v319, 4
        %v321 = vadd.f32 %v319, %v320
        %v322 = vrot.slane %v321, 2
        %v323 = vadd.f32 %v321, %v322
        %v324 = vrot.slane %v323, 1
        %v325 = vadd.f32 %v323, %v324
        %s326 = vtos %v325
        %v327 = vstv %s326
        %328 = vst [vmem:[%s186] sm:$0x1] %v327
        %s329 = sand.u32 %s77, 1
        %s330 = scalar_lea.sflag [#allocation4], %s329
        %s331 = sand.u32 %s77, 1
        %s332 = smul.addr %s331, 8
        %s333 = scalar_lea.vmem [#allocation5], %s332
        %s334 = sand.u32 %s103, 1
        %s335 = scalar_lea.sflag [#allocation7], %s334
        %s336 = sand.u32 %s103, 1
        %s337 = scalar_lea.vmem [#allocation6], %s336
        // Predicated region
        $region33: #{tpu_custom_call.1} parent=27 // pred_check
          %p338 = pneg %p87
        $region34: #{tpu_custom_call.1} parent=27 // pred_check_branch
          %340 = sbr.rel (%p338) target = $region36
        $region35: #{tpu_custom_call.1} parent=27 // pred_region
          %s342 = ssub.s32 128, 128
          %343 = vsyncadd %s330, %s342
          %s344 = smul.addr %s22, 128
          %s345 = scalar_lea.hbm %s2, %s344
          %s347 = sshll.u32 %s333, 4
          %s348 = int_to_ptr.vmem [resolvable:$true] %s347
          %350 = dma.vmem_to_hbm [thread:$0]  %s348, 128, %s345, %s330
        $region36: #{tpu_custom_call.1} parent=27 // pred_fallthru
          _
        // Predicated region
        $region37: #{tpu_custom_call.1} parent=27 // pred_check
          %p351 = pneg %p113
        $region38: #{tpu_custom_call.1} parent=27 // pred_check_branch
          %353 = sbr.rel (%p351) target = $region40
        $region39: #{tpu_custom_call.1} parent=27 // pred_region
          %s355 = ssub.s32 16, 16
          %356 = vsyncadd %s335, %s355
          %s357 = smul.addr %s22, 16
          %s358 = scalar_lea.hbm %s3, %s357
          %s360 = sshll.u32 %s337, 4
          %s361 = int_to_ptr.vmem [resolvable:$true] %s360
          %363 = dma.vmem_to_hbm [thread:$0]  %s361, 16, %s358, %s335
        $region40: #{tpu_custom_call.1} parent=27 // pred_fallthru
          _
      $region28: #{tpu_custom_call.1} parent=5 // pred_fallthru
        _
      %p364 = scmp.le.s32.totalorder 2, %s17
      // Predicated region
      $region41: #{tpu_custom_call.1} parent=5 // pred_check
        %p365 = pneg %p364
      $region42: #{tpu_custom_call.1} parent=5 // pred_check_branch
        %367 = sbr.rel (%p365) target = $region44
      $region43: #{tpu_custom_call.1} parent=5 // pred_region
        %s368 = ssub.s32 %s17, 2
        // Predicated region
        $region45: #{tpu_custom_call.1} parent=43 // pred_check
          %p369 = pneg %p93
        $region46: #{tpu_custom_call.1} parent=43 // pred_check_branch
          %371 = sbr.rel (%p369) target = $region48
        $region47: #{tpu_custom_call.1} parent=43 // pred_region
          %s372 = sand.u32 %s78, 1
          %s373 = scalar_lea.sflag [#allocation4], %s372
          %s374 = sand.u32 %s78, 1
          %s375 = smul.addr %s374, 8
          %s376 = scalar_lea.vmem [#allocation5], %s375
          %377 = dma.done %s373, 128
        $region48: #{tpu_custom_call.1} parent=43 // pred_fallthru
          _
        // Predicated region
        $region49: #{tpu_custom_call.1} parent=43 // pred_check
          %p378 = pneg %p119
        $region50: #{tpu_custom_call.1} parent=43 // pred_check_branch
          %380 = sbr.rel (%p378) target = $region52
        $region51: #{tpu_custom_call.1} parent=43 // pred_region
          %s381 = sand.u32 %s104, 1
          %s382 = scalar_lea.sflag [#allocation7], %s381
          %s383 = sand.u32 %s104, 1
          %s384 = scalar_lea.vmem [#allocation6], %s383
          %385 = dma.done %s382, 16
        $region52: #{tpu_custom_call.1} parent=43 // pred_fallthru
          _
      $region44: #{tpu_custom_call.1} parent=5 // pred_fallthru
        _
    $region6: #{tpu_custom_call.1} parent=1 // loop_footer
      %s21 = sadd.s32 1, %s17
    $region7: #{tpu_custom_call.1} parent=1 // loop_footer_branch
      %16 = sbr.rel target = $region3
    $region8: #{tpu_custom_call.1} parent=1 // loop_exit
      _
    %386 = vsyncpa [#allocation3], 1
    %s387 = scalar_lea.sflag [#allocation3], 1
    %388 = vsyncpa %s387, 1
    %389 = vsyncpa [#allocation4], 1
    %s390 = scalar_lea.sflag [#allocation4], 1
    %391 = vsyncpa %s390, 1
    %392 = vsyncpa [#allocation7], 1
    %s393 = scalar_lea.sflag [#allocation7], 1
    %394 = vsyncpa %s393, 1

</llo_original>
